<compile_context>
chip_gen: v6e
topology: v6e:2x2x1
jax: 0.10.0
libtpu: 0.0.40
codegen_flags: <defaults>
</compile_context>

<pallas_src>
import jax
import jax.numpy as jnp
from jax.experimental import pallas as pl
from jax.experimental.pallas import tpu as pltpu

LANE = 128


def _round_up(v, m):
    return (v + m - 1) // m * m


# -----------------------------------------------------------------------------
# Kernel 1: banded A @ x aggregation + GraphConv + ReLU + per-row-tile mean-pool.
# Grid: (row tiles, band-relative k).  Row axis is "parallel" (disjoint outputs).
# -----------------------------------------------------------------------------
def _gnn_agg_kernel(klo_ref, khi_ref,                      # scalar prefetch (SMEM)
                    a_ref, xk_ref, xi_ref, p_ref,          # tiled inputs
                    w_rel_ref, w_root_ref, b_rel_ref,
                    part_ref,                              # per-row-tile pooled output
                    agg_ref):                              # VMEM scratch
    i = pl.program_id(0)
    k = pl.program_id(1)

    # Zero the neighbour-sum accumulator at the start of each row tile's band sweep.
    @pl.when(k == 0)
    def _():
        agg_ref[...] = jnp.zeros_like(agg_ref)

    kb = klo_ref[i] + k          # absolute k block for this band-relative step
    last = khi_ref[i]

    # In-band: bf16 x bf16 MXU matmul, f32 accumulation.
    @pl.when(kb <= last)
    def _():
        agg_ref[...] += jnp.dot(a_ref[...], xk_ref[...],
                                preferred_element_type=jnp.float32)

    # Last in-band step for this row tile: GraphConv (two dots, no concat), ReLU
    # (dropout = identity in eval mode), then this row tile's mean-pool partial.
    @pl.when(kb == last)
    def _():
        h = (jnp.dot(agg_ref[...], w_rel_ref[...], preferred_element_type=jnp.float32)
             + jnp.dot(xi_ref[...], w_root_ref[...], preferred_element_type=jnp.float32)
             + b_rel_ref[...])
        h = jnp.maximum(h, 0.0)
        part_ref[0] = jnp.dot(p_ref[...], h, preferred_element_type=jnp.float32)


# -----------------------------------------------------------------------------
# Kernel 2: reduce pooled partials over row tiles, ReLU, Linear head.
# -----------------------------------------------------------------------------
def _gnn_head_kernel(part_ref, w_lin_ref, b_lin_ref, out_ref, pooled_ref):
    i = pl.program_id(0)

    @pl.when(i == 0)
    def _():
        pooled_ref[...] = jnp.zeros_like(pooled_ref)

    pooled_ref[...] += part_ref[0]

    @pl.when(i == pl.num_programs(0) - 1)
    def _():
        pooled = jnp.maximum(pooled_ref[...], 0.0)   # ReLU (dropout = identity in eval)
        out_ref[...] = jnp.dot(pooled, w_lin_ref[...],
                               preferred_element_type=jnp.float32) + b_lin_ref[...]


def graph_gnn_forward(x, edge_index, batch, params, num_graphs):
    """x: [N, F] f32, edge_index: [2, E] i32, batch: [N] i32 (sorted, PyG-style)."""
    N, F = x.shape
    G = num_graphs
    H = params["w_rel"].shape[0]
    C = params["w_lin"].shape[0]

    # Lane-dense padded feature dims (unmasked stores, dense MXU output columns).
    Fp = _round_up(F, LANE)
    Hp = _round_up(H, LANE)
    Cp = _round_up(C, LANE)
    Gp = _round_up(G, 8)

    # Node-dim tiling: single tile for small graphs, large tiles otherwise.
    if N <= 1024:
        Np = _round_up(N, LANE)
        tm = tk = Np
    else:
        tm, tk = 512, 1024
        Np = _round_up(N, tk)
    ni = Np // tm
    nk = Np // tk

    src = edge_index[0].astype(jnp.int32)
    dst = edge_index[1].astype(jnp.int32)

    # Dense adjacency A[dst, src] += 1, stored bf16 (exact for multiplicities < 256)
    # -> halves the HBM/VMEM traffic of the dominant operand; accumulation stays f32.
    A = jnp.zeros((Np, Np), jnp.float32).at[dst, src].add(1.0).astype(jnp.bfloat16)

    # Per-row-tile nonzero k-block band (A is block-diagonal for batched graphs).
    row_block = dst // tm
    col_block = src // tk
    k_lo = jnp.full((ni,), nk - 1, jnp.int32).at[row_block].min(col_block)
    k_hi = jnp.zeros((ni,), jnp.int32).at[row_block].max(col_block)
    k_lo = jnp.minimum(k_lo, k_hi)            # edge-less row tiles -> band [0, 0]
    nband = int(jnp.max(k_hi - k_lo)) + 1     # band-relative grid extent (host const)

    # Mean-pool matrix P[g, n] = 1/|graph g| for nodes n of graph g (zero-padded).
    onehot = (batch[None, :] == jnp.arange(G)[:, None]).astype(jnp.float32)   # [G, N]
    counts = jnp.maximum(onehot.sum(axis=1, keepdims=True), 1.0)
    P = jnp.zeros((Gp, Np), jnp.float32).at[:G, :N].set(onehot / counts)

    # Node features: bf16 neighbour stream (feeds bf16 MXU A@x), f32 root stream.
    x_f32 = jnp.zeros((Np, Fp), jnp.float32).at[:N, :F].set(x.astype(jnp.float32))
    x_bf16 = x_f32.astype(jnp.bfloat16)

    # Padded GraphConv / head weights (separate rel/root -> no in-kernel concat).
    w_rel_p = jnp.zeros((Fp, Hp), jnp.float32).at[:F, :H].set(params["w_rel"].T)
    w_root_p = jnp.zeros((Fp, Hp), jnp.float32).at[:F, :H].set(params["w_root"].T)
    b_rel_p = jnp.zeros((1, Hp), jnp.float32).at[0, :H].set(params["b_rel"])
    w_lin_p = jnp.zeros((Hp, Cp), jnp.float32).at[:H, :C].set(params["w_lin"].T)
    b_lin_p = jnp.zeros((1, Cp), jnp.float32).at[0, :C].set(params["b_lin"])

    # Band-relative absolute k block; out-of-band steps re-use the last fetched
    # block (no DMA) and their compute is gated off inside the kernel.
    def _kblk(i, k, klo, khi):
        return jnp.minimum(klo[i] + k, khi[i])

    grid_spec = pltpu.PrefetchScalarGridSpec(
        num_scalar_prefetch=2,
        grid=(ni, nband),
        in_specs=[
            pl.BlockSpec((tm, tk), lambda i, k, klo, khi: (i, _kblk(i, k, klo, khi))),  # A
            pl.BlockSpec((tk, Fp), lambda i, k, klo, khi: (_kblk(i, k, klo, khi), 0)),  # x (nbrs, bf16)
            pl.BlockSpec((tm, Fp), lambda i, k, klo, khi: (i, 0)),                      # x (root, f32)
            pl.BlockSpec((Gp, tm), lambda i, k, klo, khi: (0, i)),                      # P cols
            pl.BlockSpec((Fp, Hp), lambda i, k, klo, khi: (0, 0)),                      # W_rel
            pl.BlockSpec((Fp, Hp), lambda i, k, klo, khi: (0, 0)),                      # W_root
            pl.BlockSpec((1, Hp), lambda i, k, klo, khi: (0, 0)),                       # b_rel
        ],
        out_specs=pl.BlockSpec((1, Gp, Hp), lambda i, k, klo, khi: (i, 0, 0)),
        scratch_shapes=[pltpu.VMEM((tm, Fp), jnp.float32)],   # neighbour-sum accumulator
    )

    vmem_bytes = 64 * 1024 * 1024 if N > 1024 else None

    pooled_parts = pl.pallas_call(
        _gnn_agg_kernel,
        out_shape=jax.ShapeDtypeStruct((ni, Gp, Hp), jnp.float32),
        grid_spec=grid_spec,
        compiler_params=pltpu.CompilerParams(
            dimension_semantics=("parallel", "arbitrary"),
            vmem_limit_bytes=vmem_bytes),
    )(k_lo, k_hi, A, x_bf16, x_f32, P, w_rel_p, w_root_p, b_rel_p)

    head_spec = pltpu.PrefetchScalarGridSpec(
        num_scalar_prefetch=0,
        grid=(ni,),
        in_specs=[
            pl.BlockSpec((1, Gp, Hp), lambda i: (i, 0, 0)),
            pl.BlockSpec((Hp, Cp), lambda i: (0, 0)),
            pl.BlockSpec((1, Cp), lambda i: (0, 0)),
        ],
        out_specs=pl.BlockSpec((Gp, Cp), lambda i: (0, 0)),
        scratch_shapes=[pltpu.VMEM((Gp, Hp), jnp.float32)],
    )

    out = pl.pallas_call(
        _gnn_head_kernel,
        out_shape=jax.ShapeDtypeStruct((Gp, Cp), jnp.float32),
        grid_spec=head_spec,
        compiler_params=pltpu.CompilerParams(
            dimension_semantics=("arbitrary",)),
    )(pooled_parts, w_lin_p, b_lin_p)

    return out[:G, :C]


def init_params(key, in_features, gcn_hidden, num_classes):
    """Deterministic synthetic parameter init (PyTorch-layer shapes)."""
    k1, k2, k3, k4, k5 = jax.random.split(key, 5)
    s_in = 1.0 / jnp.sqrt(in_features)
    s_h = 1.0 / jnp.sqrt(gcn_hidden)
    return {
        # GraphConv(in_features, gcn_hidden): lin_rel (bias) + lin_root (no bias)
        "w_rel":  jax.random.uniform(k1, (gcn_hidden, in_features), jnp.float32, -s_in, s_in),
        "b_rel":  jax.random.uniform(k2, (gcn_hidden,), jnp.float32, -s_in, s_in),
        "w_root": jax.random.uniform(k3, (gcn_hidden, in_features), jnp.float32, -s_in, s_in),
        # Linear(gcn_hidden, num_classes)
        "w_lin":  jax.random.uniform(k4, (num_classes, gcn_hidden), jnp.float32, -s_h, s_h),
        "b_lin":  jax.random.uniform(k5, (num_classes,), jnp.float32, -s_h, s_h),
    }


def _reference(x, edge_index, batch, params, num_graphs, agg_in_bf16=False):
    """Pure-JAX reference matching the PyTorch forward (eval mode)."""
    N = x.shape[0]
    A = jnp.zeros((N, N), jnp.float32).at[edge_index[1], edge_index[0]].add(1.0)
    if agg_in_bf16:
        agg = (A.astype(jnp.bfloat16).astype(jnp.float32)
               @ x.astype(jnp.bfloat16).astype(jnp.float32))
    else:
        agg = A @ x
    h = agg @ params["w_rel"].T + params["b_rel"] + x @ params["w_root"].T
    h = jnp.maximum(h, 0.0)
    onehot = (batch[None, :] == jnp.arange(num_graphs)[:, None]).astype(jnp.float32)
    pooled = (onehot @ h) / jnp.maximum(onehot.sum(1, keepdims=True), 1.0)
    pooled = jnp.maximum(pooled, 0.0)
    return pooled @ params["w_lin"].T + params["b_lin"]


if __name__ == "__main__":
    key = jax.random.PRNGKey(0)

    # Small deterministic example: 2 graphs, 8 nodes each (bidirectional rings).
    in_features = 8
    gcn_hidden = 16
    num_classes = 3
    nodes_per_graph = 8
    num_graphs = 2
    N = nodes_per_graph * num_graphs

    kx, kp = jax.random.split(key)
    x = jax.random.normal(kx, (N, in_features), jnp.float32)

    edges = []
    for g in range(num_graphs):
        base = g * nodes_per_graph
        for i in range(nodes_per_graph):
            j = (i + 1) % nodes_per_graph
            edges.append((base + i, base + j))
            edges.append((base + j, base + i))
    edge_index = jnp.array(edges, dtype=jnp.int32).T                # [2, E]
    batch = jnp.repeat(jnp.arange(num_graphs, dtype=jnp.int32), nodes_per_graph)

    params = init_params(kp, in_features, gcn_hidden, num_classes)

    out = graph_gnn_forward(x, edge_index, batch, params, num_graphs)
    out = jax.block_until_ready(out)
    assert out.shape == (num_graphs, num_classes)

    # Tight check vs a reference using the same bf16-rounded aggregation inputs
    # (verifies the kernel math exactly).
    ref_bf16 = _reference(x, edge_index, batch, params, num_graphs, agg_in_bf16=True)
    assert jnp.allclose(out, ref_bf16, atol=1e-4, rtol=1e-4), (out, ref_bf16)

    # Loose check vs the pure-f32 module semantics (bf16 A/x aggregation tolerance).
    ref_f32 = _reference(x, edge_index, batch, params, num_graphs)
    assert jnp.allclose(out, ref_f32, atol=5e-2, rtol=5e-2), (out, ref_f32)

    print("KERNEL_OK")
</pallas_src>

<mosaic_0001>
module attributes {stable_mosaic.version = 11 : i64} {
  func.func @_gnn_agg_kernel(%arg0: i32, %arg1: i32, %arg2: memref<1xi32, #tpu.memory_space<smem>>, %arg3: memref<1xi32, #tpu.memory_space<smem>>, %arg4: memref<128x128xbf16, #tpu.memory_space<vmem>>, %arg5: memref<128x128xbf16, #tpu.memory_space<vmem>>, %arg6: memref<128x128xf32, #tpu.memory_space<vmem>>, %arg7: memref<8x128xf32, #tpu.memory_space<vmem>>, %arg8: memref<128x128xf32, #tpu.memory_space<vmem>>, %arg9: memref<128x128xf32, #tpu.memory_space<vmem>>, %arg10: memref<1x128xf32, #tpu.memory_space<vmem>>, %arg11: memref<1x8x128xf32, #tpu.memory_space<vmem>>, %arg12: memref<128x128xf32, #tpu.memory_space<vmem>>) attributes {dimension_semantics = [#tpu.dimension_semantics<parallel>, #tpu.dimension_semantics<arbitrary>], iteration_bounds = array<i64: 1, 1>, scalar_prefetch = 2 : i64, scratch_operands = 1 : i64, tpu.core_type = #tpu.core_type<tc>, window_params = [{transform_indices = @transform_0, window_bounds = array<i64: 128, 128>}, {transform_indices = @transform_1, window_bounds = array<i64: 128, 128>}, {transform_indices = @transform_2, window_bounds = array<i64: 128, 128>}, {transform_indices = @transform_3, window_bounds = array<i64: 8, 128>}, {pipeline_mode = #tpu.pipeline_mode<synchronous>, transform_indices = @transform_4, window_bounds = array<i64: 128, 128>}, {pipeline_mode = #tpu.pipeline_mode<synchronous>, transform_indices = @transform_5, window_bounds = array<i64: 128, 128>}, {pipeline_mode = #tpu.pipeline_mode<synchronous>, transform_indices = @transform_6, window_bounds = array<i64: 1, 128>}, {transform_indices = @transform_7, window_bounds = array<i64: 1, 8, 128>}]} {
    %c0_i32 = arith.constant 0 : i32
    %0 = arith.cmpi eq, %arg1, %c0_i32 : i32
    %1 = arith.extui %0 : i1 to i32
    %c0_i32_0 = arith.constant 0 : i32
    %2 = arith.cmpi ne, %1, %c0_i32_0 : i32
    scf.if %2 {
      %cst = arith.constant 0.000000e+00 : f32
      %14 = vector.broadcast %cst : f32 to vector<128x128xf32>
      %c0 = arith.constant 0 : index
      %c0_3 = arith.constant 0 : index
      %15 = vector.load %arg12[%c0, %c0_3] : memref<128x128xf32, #tpu.memory_space<vmem>>, vector<128x128xf32>
      tpu.vector_store %arg12[%c0, %c0_3], %14 {strides = array<i32>} : memref<128x128xf32, #tpu.memory_space<vmem>>, vector<128x128xf32>,
    } else {
    }
    %3 = arith.index_cast %arg0 : i32 to index
    %4 = memref.load %arg2[%3] : memref<1xi32, #tpu.memory_space<smem>>
    %5 = arith.addi %4, %arg1 : i32
    %6 = arith.index_cast %arg0 : i32 to index
    %7 = memref.load %arg3[%6] : memref<1xi32, #tpu.memory_space<smem>>
    %8 = arith.cmpi sle, %5, %7 : i32
    %9 = arith.extui %8 : i1 to i32
    %c0_i32_1 = arith.constant 0 : i32
    %10 = arith.cmpi ne, %9, %c0_i32_1 : i32
    scf.if %10 {
      %c0 = arith.constant 0 : index
      %c0_3 = arith.constant 0 : index
      %14 = vector.load %arg12[%c0, %c0_3] : memref<128x128xf32, #tpu.memory_space<vmem>>, vector<128x128xf32>
      %c0_4 = arith.constant 0 : index
      %c0_5 = arith.constant 0 : index
      %15 = vector.load %arg4[%c0_4, %c0_5] : memref<128x128xbf16, #tpu.memory_space<vmem>>, vector<128x128xbf16>
      %c0_6 = arith.constant 0 : index
      %c0_7 = arith.constant 0 : index
      %16 = vector.load %arg5[%c0_6, %c0_7] : memref<128x128xbf16, #tpu.memory_space<vmem>>, vector<128x128xbf16>
      %cst = arith.constant dense<0.000000e+00> : vector<128x128xf32>
      %17 = tpu.matmul %15, %16, %cst {dimension_numbers = #tpu.dot_dimension_numbers<[1], [0], [0], [1], [0, 0, 1, 1], [], []>} : vector<128x128xbf16>, vector<128x128xbf16>, vector<128x128xf32> -> vector<128x128xf32>
      %18 = arith.addf %14, %17 : vector<128x128xf32>
      %c0_8 = arith.constant 0 : index
      %c0_9 = arith.constant 0 : index
      %19 = vector.load %arg12[%c0_8, %c0_9] : memref<128x128xf32, #tpu.memory_space<vmem>>, vector<128x128xf32>
      tpu.vector_store %arg12[%c0_8, %c0_9], %18 {strides = array<i32>} : memref<128x128xf32, #tpu.memory_space<vmem>>, vector<128x128xf32>,
    } else {
    }
    %11 = arith.cmpi eq, %5, %7 : i32
    %12 = arith.extui %11 : i1 to i32
    %c0_i32_2 = arith.constant 0 : i32
    %13 = arith.cmpi ne, %12, %c0_i32_2 : i32
    scf.if %13 {
      %c0 = arith.constant 0 : index
      %c0_3 = arith.constant 0 : index
      %14 = vector.load %arg12[%c0, %c0_3] : memref<128x128xf32, #tpu.memory_space<vmem>>, vector<128x128xf32>
      %c0_4 = arith.constant 0 : index
      %c0_5 = arith.constant 0 : index
      %15 = vector.load %arg8[%c0_4, %c0_5] : memref<128x128xf32, #tpu.memory_space<vmem>>, vector<128x128xf32>
      %cst = arith.constant dense<0.000000e+00> : vector<128x128xf32>
      %16 = tpu.matmul %14, %15, %cst {dimension_numbers = #tpu.dot_dimension_numbers<[1], [0], [0], [1], [0, 0, 1, 1], [], []>} : vector<128x128xf32>, vector<128x128xf32>, vector<128x128xf32> -> vector<128x128xf32>
      %c0_6 = arith.constant 0 : index
      %c0_7 = arith.constant 0 : index
      %17 = vector.load %arg6[%c0_6, %c0_7] : memref<128x128xf32, #tpu.memory_space<vmem>>, vector<128x128xf32>
      %c0_8 = arith.constant 0 : index
      %c0_9 = arith.constant 0 : index
      %18 = vector.load %arg9[%c0_8, %c0_9] : memref<128x128xf32, #tpu.memory_space<vmem>>, vector<128x128xf32>
      %cst_10 = arith.constant dense<0.000000e+00> : vector<128x128xf32>
      %19 = tpu.matmul %17, %18, %cst_10 {dimension_numbers = #tpu.dot_dimension_numbers<[1], [0], [0], [1], [0, 0, 1, 1], [], []>} : vector<128x128xf32>, vector<128x128xf32>, vector<128x128xf32> -> vector<128x128xf32>
      %20 = arith.addf %16, %19 : vector<128x128xf32>
      %c0_11 = arith.constant 0 : index
      %c0_12 = arith.constant 0 : index
      %21 = vector.load %arg10[%c0_11, %c0_12] : memref<1x128xf32, #tpu.memory_space<vmem>>, vector<1x128xf32>
      %22 = vector.broadcast %21 : vector<1x128xf32> to vector<128x128xf32>
      %23 = arith.addf %20, %22 : vector<128x128xf32>
      %cst_13 = arith.constant 0.000000e+00 : f32
      %24 = vector.broadcast %cst_13 : f32 to vector<128x128xf32>
      %25 = arith.maximumf %23, %24 : vector<128x128xf32>
      %c0_14 = arith.constant 0 : index
      %c0_15 = arith.constant 0 : index
      %26 = vector.load %arg7[%c0_14, %c0_15] : memref<8x128xf32, #tpu.memory_space<vmem>>, vector<8x128xf32>
      %cst_16 = arith.constant dense<0.000000e+00> : vector<8x128xf32>
      %27 = tpu.matmul %26, %25, %cst_16 {dimension_numbers = #tpu.dot_dimension_numbers<[1], [0], [0], [1], [0, 0, 1, 1], [], []>} : vector<8x128xf32>, vector<128x128xf32>, vector<8x128xf32> -> vector<8x128xf32>
      %c0_17 = arith.constant 0 : index
      %c0_18 = arith.constant 0 : index
      %c0_19 = arith.constant 0 : index
      %28 = vector.load %arg11[%c0_17, %c0_18, %c0_19] : memref<1x8x128xf32, #tpu.memory_space<vmem>>, vector<1x8x128xf32>
      %29 = vector.shape_cast %28 : vector<1x8x128xf32> to vector<8x128xf32>
      %30 = vector.shape_cast %27 : vector<8x128xf32> to vector<1x8x128xf32>
      tpu.vector_store %arg11[%c0_17, %c0_18, %c0_19], %30 {strides = array<i32>} : memref<1x8x128xf32, #tpu.memory_space<vmem>>, vector<1x8x128xf32>,
    } else {
    }
    return
  }
  func.func @transform_0(%arg0: i32, %arg1: i32, %arg2: memref<1xi32, #tpu.memory_space<smem>>, %arg3: memref<1xi32, #tpu.memory_space<smem>>) -> (i32, i32) {
    %0 = arith.index_cast %arg0 : i32 to index
    %1 = memref.load %arg2[%0] : memref<1xi32, #tpu.memory_space<smem>>
    %2 = arith.addi %1, %arg1 : i32
    %3 = arith.index_cast %arg0 : i32 to index
    %4 = memref.load %arg3[%3] : memref<1xi32, #tpu.memory_space<smem>>
    %5 = arith.minsi %2, %4 : i32
    %c0_i32 = arith.constant 0 : i32
    return %arg0, %5 : i32, i32
  }
  func.func @transform_1(%arg0: i32, %arg1: i32, %arg2: memref<1xi32, #tpu.memory_space<smem>>, %arg3: memref<1xi32, #tpu.memory_space<smem>>) -> (i32, i32) {
    %0 = arith.index_cast %arg0 : i32 to index
    %1 = memref.load %arg2[%0] : memref<1xi32, #tpu.memory_space<smem>>
    %2 = arith.addi %1, %arg1 : i32
    %3 = arith.index_cast %arg0 : i32 to index
    %4 = memref.load %arg3[%3] : memref<1xi32, #tpu.memory_space<smem>>
    %5 = arith.minsi %2, %4 : i32
    %c0_i32 = arith.constant 0 : i32
    %c0_i32_0 = arith.constant 0 : i32
    return %5, %c0_i32 : i32, i32
  }
  func.func @transform_2(%arg0: i32, %arg1: i32, %arg2: memref<1xi32, #tpu.memory_space<smem>>, %arg3: memref<1xi32, #tpu.memory_space<smem>>) -> (i32, i32) {
    %c0_i32 = arith.constant 0 : i32
    %c0_i32_0 = arith.constant 0 : i32
    return %arg0, %c0_i32 : i32, i32
  }
  func.func @transform_3(%arg0: i32, %arg1: i32, %arg2: memref<1xi32, #tpu.memory_space<smem>>, %arg3: memref<1xi32, #tpu.memory_space<smem>>) -> (i32, i32) {
    %c0_i32 = arith.constant 0 : i32
    %c0_i32_0 = arith.constant 0 : i32
    return %c0_i32, %arg0 : i32, i32
  }
  func.func @transform_4(%arg0: i32, %arg1: i32, %arg2: memref<1xi32, #tpu.memory_space<smem>>, %arg3: memref<1xi32, #tpu.memory_space<smem>>) -> (i32, i32) {
    %c0_i32 = arith.constant 0 : i32
    %c0_i32_0 = arith.constant 0 : i32
    %c0_i32_1 = arith.constant 0 : i32
    return %c0_i32, %c0_i32_0 : i32, i32
  }
  func.func @transform_5(%arg0: i32, %arg1: i32, %arg2: memref<1xi32, #tpu.memory_space<smem>>, %arg3: memref<1xi32, #tpu.memory_space<smem>>) -> (i32, i32) {
    %c0_i32 = arith.constant 0 : i32
    %c0_i32_0 = arith.constant 0 : i32
    %c0_i32_1 = arith.constant 0 : i32
    return %c0_i32, %c0_i32_0 : i32, i32
  }
  func.func @transform_6(%arg0: i32, %arg1: i32, %arg2: memref<1xi32, #tpu.memory_space<smem>>, %arg3: memref<1xi32, #tpu.memory_space<smem>>) -> (i32, i32) {
    %c0_i32 = arith.constant 0 : i32
    %c0_i32_0 = arith.constant 0 : i32
    %c0_i32_1 = arith.constant 0 : i32
    return %c0_i32, %c0_i32_0 : i32, i32
  }
  func.func @transform_7(%arg0: i32, %arg1: i32, %arg2: memref<1xi32, #tpu.memory_space<smem>>, %arg3: memref<1xi32, #tpu.memory_space<smem>>) -> (i32, i32, i32) {
    %c0_i32 = arith.constant 0 : i32
    %c0_i32_0 = arith.constant 0 : i32
    %c0_i32_1 = arith.constant 0 : i32
    return %arg0, %c0_i32, %c0_i32_0 : i32, i32, i32
  }
}

</mosaic_0001>

<llo_original>
// kernel: tpu_custom_call.1
$region0: #{tpu_custom_call.1}
  #allocation0 [shape = 'u32[]', space=smem, size = 0x4, offset = 0x4, fixed_abs, tag = 'smem constant byte address 0x4 - core index']
  #allocation1 [shape = 'u32[144,128]{1,0:T(1,128)}', space=vmem, size = 0x12000, scoped, tag = 'internal scratch']
  #allocation2 [shape = 'f32[128,128]{1,0:T(8,128)}', space=vmem, size = 0x10000, scoped, tag = 'scratch operand']
  #allocation3 [shape = 's32[1]{0}', space=sflag, size = 0x4, scoped, tag = 'scoped memory for tpu_custom_call.1']
  #allocation4 [shape = 's32[1]{0:T(128)S(6)}', space=smem, size = 0x200, scoped, tag = 'prefetched SMEM operand 0']
  #allocation5 [shape = 's32[1]{0:T(128)S(6)}', space=smem, size = 0x200, scoped, tag = 'prefetched SMEM operand 1']
  %s0 = inlined_call_operand.<no memory space> [shape: s32[1], index: 0, kind: input, shape index: {}]
  %s1 = inlined_call_operand.<no memory space> [shape: s32[1], index: 1, kind: input, shape index: {}]
  %s2 = inlined_call_operand.hbm [shape: bf16[128,128], index: 2, kind: input, shape index: {}]
  %s3 = inlined_call_operand.hbm [shape: bf16[128,128], index: 3, kind: input, shape index: {}]
  %s4 = inlined_call_operand.hbm [shape: f32[128,128], index: 4, kind: input, shape index: {}]
  %s5 = inlined_call_operand.vmem [shape: f32[8,128], index: 5, kind: input, shape index: {}]
  %s6 = inlined_call_operand.hbm [shape: f32[128,128], index: 6, kind: input, shape index: {}]
  %s7 = inlined_call_operand.hbm [shape: f32[128,128], index: 7, kind: input, shape index: {}]
  %s8 = inlined_call_operand.vmem [shape: f32[1,128], index: 8, kind: input, shape index: {}]
  %s9 = inlined_call_operand.hbm [shape: f32[1,8,128], index: 9, kind: output, shape index: {}]
  %s10 = sld [smem:[#allocation0]]
  $region70: #{tpu_custom_call.1} parent=0
    _
  %s12 = ssub.s32 1, %s10
  %s13 = scalar_select 0, %s12, %s10
  %14 = sst [smem:[#allocation4]] %s0
  %15 = sst [smem:[#allocation5]] %s1
  $region1: #{tpu_custom_call.1} parent=0
    #allocation6 [shape = 'u8[32768]{0}', space=vmem, size = 0x8000, scoped, tag = 'input window, operand 2, single buffered']
    #allocation7 [shape = 's32[1]{0}', space=sflag, size = 0x4, scoped, tag = 'scoped memory for tpu_custom_call.1']
    #allocation8 [shape = 's32[1]{0}', space=sflag, size = 0x4, scoped, tag = 'scoped memory for tpu_custom_call.1']
    #allocation9 [shape = 'u8[32768]{0}', space=vmem, size = 0x8000, scoped, tag = 'input window, operand 3, single buffered']
    #allocation10 [shape = 's32[1]{0}', space=sflag, size = 0x4, scoped, tag = 'scoped memory for tpu_custom_call.1']
    #allocation11 [shape = 'u8[65536]{0}', space=vmem, size = 0x10000, scoped, tag = 'input window, operand 4, single buffered']
    #allocation12 [shape = 'u8[65536]{0}', space=vmem, size = 0x10000, scoped, tag = 'input window, operand 6, single buffered']
    #allocation13 [shape = 's32[1]{0}', space=sflag, size = 0x4, scoped, tag = 'scoped memory for tpu_custom_call.1']
    #allocation14 [shape = 'u8[65536]{0}', space=vmem, size = 0x10000, scoped, tag = 'input window, operand 7, single buffered']
    #allocation15 [shape = 'u8[4096]{0}', space=vmem, size = 0x1000, scoped, tag = 'output window, operand 0, single buffered']
    %16 = vsyncpa [#allocation7], 0
    %17 = vsyncpa [#allocation10], 0
    %18 = vsyncpa [#allocation13], 0
    %19 = vsyncpa [#allocation8], 0
    // Predicated region
    $region2: #{tpu_custom_call.1} parent=1 // pred_check
      _
    $region3: #{tpu_custom_call.1} parent=1 // pred_check_branch
      %21 = sbr.rel (0) target = $region5
    $region4: #{tpu_custom_call.1} parent=1 // pred_region
      %s22 = sld [smem:[#allocation4]]
      %s23 = sadd.s32 %s22, 0
      %s24 = sld [smem:[#allocation5]]
      %p25 = scmp.lt.s32.totalorder %s23, %s24
      %s26 = scalar_select %p25, %s23, %s24
      %s28 = ssub.s32 1024, 1024
      %29 = vsyncadd [#allocation7], %s28
      %s30 = smul.addr %s26, 64
      %s31 = scalar_lea.hbm %s2, %s30
      %s32 = sshll.u32 [#allocation6], 4
      %s33 = int_to_ptr.vmem [resolvable:$true] %s32
      %38 = dma.hbm_to_vmem [thread:$0]  %s31, 1024, %s33, [#allocation7], 64, 64, 4
    $region5: #{tpu_custom_call.1} parent=1 // pred_fallthru
      _
    // Predicated region
    $region6: #{tpu_custom_call.1} parent=1 // pred_check
      _
    $region7: #{tpu_custom_call.1} parent=1 // pred_check_branch
      %40 = sbr.rel (0) target = $region9
    $region8: #{tpu_custom_call.1} parent=1 // pred_region
      %s41 = sld [smem:[#allocation4]]
      %s42 = sadd.s32 %s41, 0
      %s43 = sld [smem:[#allocation5]]
      %p44 = scmp.lt.s32.totalorder %s42, %s43
      %s45 = scalar_select %p44, %s42, %s43
      %s46 = smul.u32 16, %s45
      %s48 = ssub.s32 1024, 1024
      %49 = vsyncadd [#allocation10], %s48
      %s50 = smul.addr %s46, 64
      %s51 = scalar_lea.hbm %s3, %s50
      %s52 = sshll.u32 [#allocation9], 4
      %s53 = int_to_ptr.vmem [resolvable:$true] %s52
      %58 = dma.hbm_to_vmem [thread:$0]  %s51, 1024, %s53, [#allocation10], 64, 64, 4
    $region9: #{tpu_custom_call.1} parent=1 // pred_fallthru
      _
    // Predicated region
    $region10: #{tpu_custom_call.1} parent=1 // pred_check
      _
    $region11: #{tpu_custom_call.1} parent=1 // pred_check_branch
      %60 = sbr.rel (0) target = $region13
    $region12: #{tpu_custom_call.1} parent=1 // pred_region
      %s62 = ssub.s32 2048, 2048
      %63 = vsyncadd [#allocation10], %s62
      %s64 = sshll.u32 [#allocation11], 4
      %s65 = int_to_ptr.vmem [resolvable:$true] %s64
      %70 = dma.hbm_to_vmem [thread:$0]  %s4, 2048, %s65, [#allocation10], 128, 128, 8
    $region13: #{tpu_custom_call.1} parent=1 // pred_fallthru
      _
    // Predicated region
    $region14: #{tpu_custom_call.1} parent=1 // pred_check
      _
    $region15: #{tpu_custom_call.1} parent=1 // pred_check_branch
      %72 = sbr.rel (0) target = $region17
    $region16: #{tpu_custom_call.1} parent=1 // pred_region
      _
    $region17: #{tpu_custom_call.1} parent=1 // pred_fallthru
      _
    // Predicated region
    $region18: #{tpu_custom_call.1} parent=1 // pred_check
      _
    $region19: #{tpu_custom_call.1} parent=1 // pred_check_branch
      %74 = sbr.rel (0) target = $region21
    $region20: #{tpu_custom_call.1} parent=1 // pred_region
      %s76 = ssub.s32 2048, 2048
      %77 = vsyncadd [#allocation13], %s76
      %s78 = sshll.u32 [#allocation12], 4
      %s79 = int_to_ptr.vmem [resolvable:$true] %s78
      %84 = dma.hbm_to_vmem [thread:$0]  %s6, 2048, %s79, [#allocation13], 128, 128, 8
    $region21: #{tpu_custom_call.1} parent=1 // pred_fallthru
      _
    // Predicated region
    $region22: #{tpu_custom_call.1} parent=1 // pred_check
      _
    $region23: #{tpu_custom_call.1} parent=1 // pred_check_branch
      %86 = sbr.rel (0) target = $region25
    $region24: #{tpu_custom_call.1} parent=1 // pred_region
      %s88 = ssub.s32 2048, 2048
      %89 = vsyncadd [#allocation13], %s88
      %s90 = sshll.u32 [#allocation14], 4
      %s91 = int_to_ptr.vmem [resolvable:$true] %s90
      %96 = dma.hbm_to_vmem [thread:$0]  %s7, 2048, %s91, [#allocation13], 128, 128, 8
    $region25: #{tpu_custom_call.1} parent=1 // pred_fallthru
      _
    // Predicated region
    $region26: #{tpu_custom_call.1} parent=1 // pred_check
      _
    $region27: #{tpu_custom_call.1} parent=1 // pred_check_branch
      %98 = sbr.rel (0) target = $region29
    $region28: #{tpu_custom_call.1} parent=1 // pred_region
      _
    $region29: #{tpu_custom_call.1} parent=1 // pred_fallthru
      _
    // Predicated region
    $region30: #{tpu_custom_call.1} parent=1 // pred_check
      _
    $region31: #{tpu_custom_call.1} parent=1 // pred_check_branch
      %100 = sbr.rel (0) target = $region33
    $region32: #{tpu_custom_call.1} parent=1 // pred_region
      %101 = dma.done [#allocation7], 1024
    $region33: #{tpu_custom_call.1} parent=1 // pred_fallthru
      _
    // Predicated region
    $region34: #{tpu_custom_call.1} parent=1 // pred_check
      _
    $region35: #{tpu_custom_call.1} parent=1 // pred_check_branch
      %103 = sbr.rel (0) target = $region37
    $region36: #{tpu_custom_call.1} parent=1 // pred_region
      %104 = dma.done [#allocation10], 1024
    $region37: #{tpu_custom_call.1} parent=1 // pred_fallthru
      _
    // Predicated region
    $region38: #{tpu_custom_call.1} parent=1 // pred_check
      _
    $region39: #{tpu_custom_call.1} parent=1 // pred_check_branch
      %106 = sbr.rel (0) target = $region41
    $region40: #{tpu_custom_call.1} parent=1 // pred_region
      %107 = dma.done [#allocation10], 2048
    $region41: #{tpu_custom_call.1} parent=1 // pred_fallthru
      _
    // Predicated region
    $region42: #{tpu_custom_call.1} parent=1 // pred_check
      _
    $region43: #{tpu_custom_call.1} parent=1 // pred_check_branch
      %109 = sbr.rel (0) target = $region45
    $region44: #{tpu_custom_call.1} parent=1 // pred_region
      %110 = dma.done [#allocation13], 2048
    $region45: #{tpu_custom_call.1} parent=1 // pred_fallthru
      _
    // Predicated region
    $region46: #{tpu_custom_call.1} parent=1 // pred_check
      _
    $region47: #{tpu_custom_call.1} parent=1 // pred_check_branch
      %112 = sbr.rel (0) target = $region49
    $region48: #{tpu_custom_call.1} parent=1 // pred_region
      %113 = dma.done [#allocation13], 2048
    $region49: #{tpu_custom_call.1} parent=1 // pred_fallthru
      _
    %s114 = sld [smem:[#allocation4]]
    %s115 = sadd.s32 %s114, 0
    %s116 = sld [smem:[#allocation5]]
    %p117 = scmp.lt.s32.totalorder %s115, %s116
    %s118 = scalar_select %p117, %s115, %s116
    %s119 = sld [smem:[#allocation4]]
    %s120 = sadd.s32 %s119, 0
    %s121 = sld [smem:[#allocation5]]
    %p122 = scmp.lt.s32.totalorder %s120, %s121
    %s123 = scalar_select %p122, %s120, %s121
    %s124 = smul.u32 16, %s123
    %p126 = scmp.eq.s32.totalorder 0, 0
    // Predicated region
    $region50: #{tpu_custom_call.1} parent=1 // pred_check
      %p127 = pneg %p126
    $region51: #{tpu_custom_call.1} parent=1 // pred_check_branch
      %129 = sbr.rel (%p127) target = $region53
    $region52: #{tpu_custom_call.1} parent=1 // pred_region
      %130 = vst [vmem:[#allocation2] sm:$0xff] 0.0
      %131 = vst [vmem:[#allocation2 + $0x8] sm:$0xff] 0.0
      %132 = vst [vmem:[#allocation2 + $0x10] sm:$0xff] 0.0
      %133 = vst [vmem:[#allocation2 + $0x18] sm:$0xff] 0.0
      %134 = vst [vmem:[#allocation2 + $0x20] sm:$0xff] 0.0
      %135 = vst [vmem:[#allocation2 + $0x28] sm:$0xff] 0.0
      %136 = vst [vmem:[#allocation2 + $0x30] sm:$0xff] 0.0
      %137 = vst [vmem:[#allocation2 + $0x38] sm:$0xff] 0.0
      %138 = vst [vmem:[#allocation2 + $0x40] sm:$0xff] 0.0
      %139 = vst [vmem:[#allocation2 + $0x48] sm:$0xff] 0.0
      %140 = vst [vmem:[#allocation2 + $0x50] sm:$0xff] 0.0
      %141 = vst [vmem:[#allocation2 + $0x58] sm:$0xff] 0.0
      %142 = vst [vmem:[#allocation2 + $0x60] sm:$0xff] 0.0
      %143 = vst [vmem:[#allocation2 + $0x68] sm:$0xff] 0.0
      %144 = vst [vmem:[#allocation2 + $0x70] sm:$0xff] 0.0
      %145 = vst [vmem:[#allocation2 + $0x78] sm:$0xff] 0.0
    $region53: #{tpu_custom_call.1} parent=1 // pred_fallthru
      _
    %s146 = sld [smem:[#allocation4]]
    %s147 = sadd.s32 %s146, 0
    %s148 = sld [smem:[#allocation5]]
    %p149 = scmp.le.s32.totalorder %s147, %s148
    // Predicated region
    $region54: #{tpu_custom_call.1} parent=1 // pred_check
      %p150 = pneg %p149
    $region55: #{tpu_custom_call.1} parent=1 // pred_check_branch
      %152 = sbr.rel (%p150) target = $region57
    $region56: #{tpu_custom_call.1} parent=1 // pred_region
      %v153 = vld [vmem:[#allocation2] sm:$0xff]
      %v154 = vld [vmem:[#allocation2 + $0x8] sm:$0xff]
      %v155 = vld [vmem:[#allocation2 + $0x10] sm:$0xff]
      %v156 = vld [vmem:[#allocation2 + $0x18] sm:$0xff]
      %v157 = vld [vmem:[#allocation2 + $0x20] sm:$0xff]
      %v158 = vld [vmem:[#allocation2 + $0x28] sm:$0xff]
      %v159 = vld [vmem:[#allocation2 + $0x30] sm:$0xff]
      %v160 = vld [vmem:[#allocation2 + $0x38] sm:$0xff]
      %v161 = vld [vmem:[#allocation2 + $0x40] sm:$0xff]
      %v162 = vld [vmem:[#allocation2 + $0x48] sm:$0xff]
      %v163 = vld [vmem:[#allocation2 + $0x50] sm:$0xff]
      %v164 = vld [vmem:[#allocation2 + $0x58] sm:$0xff]
      %v165 = vld [vmem:[#allocation2 + $0x60] sm:$0xff]
      %v166 = vld [vmem:[#allocation2 + $0x68] sm:$0xff]
      %v167 = vld [vmem:[#allocation2 + $0x70] sm:$0xff]
      %v168 = vld [vmem:[#allocation2 + $0x78] sm:$0xff]
      %v169 = vld [vmem:[#allocation6] sm:$0xf]
      %v170 = vld [vmem:[#allocation6 + $0x4] sm:$0xf]
      %v171 = vld [vmem:[#allocation6 + $0x8] sm:$0xf]
      %v172 = vld [vmem:[#allocation6 + $0xc] sm:$0xf]
      %v173 = vld [vmem:[#allocation6 + $0x10] sm:$0xf]
      %v174 = vld [vmem:[#allocation6 + $0x14] sm:$0xf]
      %v175 = vld [vmem:[#allocation6 + $0x18] sm:$0xf]
      %v176 = vld [vmem:[#allocation6 + $0x1c] sm:$0xf]
      %v177 = vld [vmem:[#allocation6 + $0x20] sm:$0xf]
      %v178 = vld [vmem:[#allocation6 + $0x24] sm:$0xf]
      %v179 = vld [vmem:[#allocation6 + $0x28] sm:$0xf]
      %v180 = vld [vmem:[#allocation6 + $0x2c] sm:$0xf]
      %v181 = vld [vmem:[#allocation6 + $0x30] sm:$0xf]
      %v182 = vld [vmem:[#allocation6 + $0x34] sm:$0xf]
      %v183 = vld [vmem:[#allocation6 + $0x38] sm:$0xf]
      %v184 = vld [vmem:[#allocation6 + $0x3c] sm:$0xf]
      %v185 = vld [vmem:[#allocation9] sm:$0xf]
      %v186 = vld [vmem:[#allocation9 + $0x4] sm:$0xf]
      %v187 = vld [vmem:[#allocation9 + $0x8] sm:$0xf]
      %v188 = vld [vmem:[#allocation9 + $0xc] sm:$0xf]
      %v189 = vld [vmem:[#allocation9 + $0x10] sm:$0xf]
      %v190 = vld [vmem:[#allocation9 + $0x14] sm:$0xf]
      %v191 = vld [vmem:[#allocation9 + $0x18] sm:$0xf]
      %v192 = vld [vmem:[#allocation9 + $0x1c] sm:$0xf]
      %v193 = vld [vmem:[#allocation9 + $0x20] sm:$0xf]
      %v194 = vld [vmem:[#allocation9 + $0x24] sm:$0xf]
      %v195 = vld [vmem:[#allocation9 + $0x28] sm:$0xf]
      %v196 = vld [vmem:[#allocation9 + $0x2c] sm:$0xf]
      %v197 = vld [vmem:[#allocation9 + $0x30] sm:$0xf]
      %v198 = vld [vmem:[#allocation9 + $0x34] sm:$0xf]
      %v199 = vld [vmem:[#allocation9 + $0x38] sm:$0xf]
      %v200 = vld [vmem:[#allocation9 + $0x3c] sm:$0xf]
      %v217 = vunpack.c.l.b16 %v169
      %v218 = vunpack.c.l.b16 %v170
      %v219 = vunpack.c.l.b16 %v171
      %v220 = vunpack.c.l.b16 %v172
      %v221 = vunpack.c.l.b16 %v173
      %v222 = vunpack.c.l.b16 %v174
      %v223 = vunpack.c.l.b16 %v175
      %v224 = vunpack.c.l.b16 %v176
      %v225 = vunpack.c.l.b16 %v177
      %v226 = vunpack.c.l.b16 %v178
      %v227 = vunpack.c.l.b16 %v179
      %v228 = vunpack.c.l.b16 %v180
      %v229 = vunpack.c.l.b16 %v181
      %v230 = vunpack.c.l.b16 %v182
      %v231 = vunpack.c.l.b16 %v183
      %v232 = vunpack.c.l.b16 %v184
      %v233 = vpack.c.b16 %v218, %v217
      %v234 = vpack.c.b16 %v220, %v219
      %v235 = vpack.c.b16 %v222, %v221
      %v236 = vpack.c.b16 %v224, %v223
      %v237 = vpack.c.b16 %v226, %v225
      %v238 = vpack.c.b16 %v228, %v227
      %v239 = vpack.c.b16 %v230, %v229
      %v240 = vpack.c.b16 %v232, %v231
      %v265 = vunpack.c.l.b16 %v185
      %v266 = vunpack.c.l.b16 %v186
      %v267 = vunpack.c.l.b16 %v187
      %v268 = vunpack.c.l.b16 %v188
      %v269 = vunpack.c.l.b16 %v189
      %v270 = vunpack.c.l.b16 %v190
      %v271 = vunpack.c.l.b16 %v191
      %v272 = vunpack.c.l.b16 %v192
      %v273 = vunpack.c.l.b16 %v193
      %v274 = vunpack.c.l.b16 %v194
      %v275 = vunpack.c.l.b16 %v195
      %v276 = vunpack.c.l.b16 %v196
      %v277 = vunpack.c.l.b16 %v197
      %v278 = vunpack.c.l.b16 %v198
      %v279 = vunpack.c.l.b16 %v199
      %v280 = vunpack.c.l.b16 %v200
      %v281 = vpack.c.b16 %v266, %v265
      %v282 = vpack.c.b16 %v268, %v267
      %v283 = vpack.c.b16 %v270, %v269
      %v284 = vpack.c.b16 %v272, %v271
      %v285 = vpack.c.b16 %v274, %v273
      %v286 = vpack.c.b16 %v276, %v275
      %v287 = vpack.c.b16 %v278, %v277
      %v288 = vpack.c.b16 %v280, %v279
      %297 = vmatprep.subr.bf16.mxu0 0
      %298 = vmatpush1.bf16.msra.mxu0 %v288
      %299 = vmatprep.subr.bf16.mxu0 0
      %300 = vmatpush1.bf16.msra.mxu0 %v287
      %301 = vmatprep.subr.bf16.mxu0 0
      %302 = vmatpush1.bf16.msra.mxu0 %v286
      %303 = vmatprep.subr.bf16.mxu0 0
      %304 = vmatpush1.bf16.msra.mxu0 %v285
      %305 = vmatprep.subr.bf16.mxu0 0
      %306 = vmatpush1.bf16.msra.mxu0 %v284
      %307 = vmatprep.subr.bf16.mxu0 0
      %308 = vmatpush1.bf16.msra.mxu0 %v283
      %309 = vmatprep.subr.bf16.mxu0 0
      %310 = vmatpush1.bf16.msra.mxu0 %v282
      %311 = vmatprep.subr.bf16.mxu0 0
      %312 = vmatpush1.bf16.msra.mxu0 %v281
      %313 = vmatprep.subr.bf16.mxu0 0
      %314 = vmatpush2.bf16.msra.mxu0 0
      %315 = vmatprep.subr.bf16.mxu0 0
      %316 = vmatpush2.bf16.msra.mxu0 0
      %317 = vmatprep.subr.bf16.mxu0 0
      %318 = vmatpush2.bf16.msra.mxu0 0
      %319 = vmatprep.subr.bf16.mxu0 0
      %320 = vmatpush2.bf16.msra.mxu0 0
      %321 = vmatprep.subr.bf16.mxu0 0
      %322 = vmatpush2.bf16.msra.mxu0 0
      %323 = vmatprep.subr.bf16.mxu0 0
      %324 = vmatpush2.bf16.msra.mxu0 0
      %325 = vmatprep.subr.bf16.mxu0 0
      %326 = vmatpush2.bf16.msra.mxu0 0
      %327 = vmatprep.subr.bf16.mxu0 0
      %328 = vmatpush2.bf16.msra.mxu0 0
      %329 = vmatprep.mubr.bf16.mxu0 0
      %330 = vmatmul.mubr.bf16.gmra.mxu0 %v233
      %v331 = vpop.f32.mrf.mxu0
      %v332 = vadd.f32 0.0, %v331
      %v333 = vpop.f32.mrf.mxu0
      %v334 = vpop.f32.mrf.mxu0
      %v335 = vadd.f32 0.0, %v334
      %v336 = vpop.f32.mrf.mxu0
      %337 = vmatprep.mubr.bf16.mxu0 0
      %338 = vmatmul.mubr.bf16.gmra.mxu0 %v234
      %v339 = vpop.f32.mrf.mxu0
      %v340 = vadd.f32 0.0, %v339
      %v341 = vpop.f32.mrf.mxu0
      %v342 = vpop.f32.mrf.mxu0
      %v343 = vadd.f32 0.0, %v342
      %v344 = vpop.f32.mrf.mxu0
      %345 = vmatprep.mubr.bf16.mxu0 0
      %346 = vmatmul.mubr.bf16.gmra.mxu0 %v235
      %v347 = vpop.f32.mrf.mxu0
      %v348 = vadd.f32 0.0, %v347
      %v349 = vpop.f32.mrf.mxu0
      %v350 = vpop.f32.mrf.mxu0
      %v351 = vadd.f32 0.0, %v350
      %v352 = vpop.f32.mrf.mxu0
      %353 = vmatprep.mubr.bf16.mxu0 0
      %354 = vmatmul.mubr.bf16.gmra.mxu0 %v236
      %v355 = vpop.f32.mrf.mxu0
      %v356 = vadd.f32 0.0, %v355
      %v357 = vpop.f32.mrf.mxu0
      %v358 = vpop.f32.mrf.mxu0
      %v359 = vadd.f32 0.0, %v358
      %v360 = vpop.f32.mrf.mxu0
      %361 = vmatprep.mubr.bf16.mxu0 0
      %362 = vmatmul.mubr.bf16.gmra.mxu0 %v237
      %v363 = vpop.f32.mrf.mxu0
      %v364 = vadd.f32 0.0, %v363
      %v365 = vpop.f32.mrf.mxu0
      %v366 = vpop.f32.mrf.mxu0
      %v367 = vadd.f32 0.0, %v366
      %v368 = vpop.f32.mrf.mxu0
      %369 = vmatprep.mubr.bf16.mxu0 0
      %370 = vmatmul.mubr.bf16.gmra.mxu0 %v238
      %v371 = vpop.f32.mrf.mxu0
      %v372 = vadd.f32 0.0, %v371
      %v373 = vpop.f32.mrf.mxu0
      %v374 = vpop.f32.mrf.mxu0
      %v375 = vadd.f32 0.0, %v374
      %v376 = vpop.f32.mrf.mxu0
      %377 = vmatprep.mubr.bf16.mxu0 0
      %378 = vmatmul.mubr.bf16.gmra.mxu0 %v239
      %v379 = vpop.f32.mrf.mxu0
      %v380 = vadd.f32 0.0, %v379
      %v381 = vpop.f32.mrf.mxu0
      %v382 = vpop.f32.mrf.mxu0
      %v383 = vadd.f32 0.0, %v382
      %v384 = vpop.f32.mrf.mxu0
      %385 = vmatprep.mubr.bf16.mxu0 0
      %386 = vmatmul.mubr.bf16.gmra.mxu0 %v240
      %v387 = vpop.f32.mrf.mxu0
      %v388 = vadd.f32 0.0, %v387
      %v389 = vpop.f32.mrf.mxu0
      %v390 = vpop.f32.mrf.mxu0
      %v391 = vadd.f32 0.0, %v390
      %v392 = vpop.f32.mrf.mxu0
      %393 = vdwg.mxu0
      %v394 = vadd.f32 %v153, %v332
      %v395 = vadd.f32 %v154, %v335
      %v396 = vadd.f32 %v155, %v340
      %v397 = vadd.f32 %v156, %v343
      %v398 = vadd.f32 %v157, %v348
      %v399 = vadd.f32 %v158, %v351
      %v400 = vadd.f32 %v159, %v356
      %v401 = vadd.f32 %v160, %v359
      %v402 = vadd.f32 %v161, %v364
      %v403 = vadd.f32 %v162, %v367
      %v404 = vadd.f32 %v163, %v372
      %v405 = vadd.f32 %v164, %v375
      %v406 = vadd.f32 %v165, %v380
      %v407 = vadd.f32 %v166, %v383
      %v408 = vadd.f32 %v167, %v388
      %v409 = vadd.f32 %v168, %v391
      %410 = vst [vmem:[#allocation2] sm:$0xff] %v394
      %411 = vst [vmem:[#allocation2 + $0x8] sm:$0xff] %v395
      %412 = vst [vmem:[#allocation2 + $0x10] sm:$0xff] %v396
      %413 = vst [vmem:[#allocation2 + $0x18] sm:$0xff] %v397
      %414 = vst [vmem:[#allocation2 + $0x20] sm:$0xff] %v398
      %415 = vst [vmem:[#allocation2 + $0x28] sm:$0xff] %v399
      %416 = vst [vmem:[#allocation2 + $0x30] sm:$0xff] %v400
      %417 = vst [vmem:[#allocation2 + $0x38] sm:$0xff] %v401
      %418 = vst [vmem:[#allocation2 + $0x40] sm:$0xff] %v402
      %419 = vst [vmem:[#allocation2 + $0x48] sm:$0xff] %v403
      %420 = vst [vmem:[#allocation2 + $0x50] sm:$0xff] %v404
      %421 = vst [vmem:[#allocation2 + $0x58] sm:$0xff] %v405
      %422 = vst [vmem:[#allocation2 + $0x60] sm:$0xff] %v406
      %423 = vst [vmem:[#allocation2 + $0x68] sm:$0xff] %v407
      %424 = vst [vmem:[#allocation2 + $0x70] sm:$0xff] %v408
      %425 = vst [vmem:[#allocation2 + $0x78] sm:$0xff] %v409
    $region57: #{tpu_custom_call.1} parent=1 // pred_fallthru
      _
    %p426 = scmp.eq.s32.totalorder %s147, %s148
    // Predicated region
    $region58: #{tpu_custom_call.1} parent=1 // pred_check
      %p427 = pneg %p426
    $region59: #{tpu_custom_call.1} parent=1 // pred_check_branch
      %429 = sbr.rel (%p427) target = $region61
    $region60: #{tpu_custom_call.1} parent=1 // pred_region
      %v430 = vld [vmem:[#allocation2] sm:$0xff]
      %v431 = vld [vmem:[#allocation2 + $0x8] sm:$0xff]
      %v432 = vld [vmem:[#allocation2 + $0x10] sm:$0xff]
      %v433 = vld [vmem:[#allocation2 + $0x18] sm:$0xff]
      %v434 = vld [vmem:[#allocation2 + $0x20] sm:$0xff]
      %v435 = vld [vmem:[#allocation2 + $0x28] sm:$0xff]
      %v436 = vld [vmem:[#allocation2 + $0x30] sm:$0xff]
      %v437 = vld [vmem:[#allocation2 + $0x38] sm:$0xff]
      %v438 = vld [vmem:[#allocation2 + $0x40] sm:$0xff]
      %v439 = vld [vmem:[#allocation2 + $0x48] sm:$0xff]
      %v440 = vld [vmem:[#allocation2 + $0x50] sm:$0xff]
      %v441 = vld [vmem:[#allocation2 + $0x58] sm:$0xff]
      %v442 = vld [vmem:[#allocation2 + $0x60] sm:$0xff]
      %v443 = vld [vmem:[#allocation2 + $0x68] sm:$0xff]
      %v444 = vld [vmem:[#allocation2 + $0x70] sm:$0xff]
      %v445 = vld [vmem:[#allocation2 + $0x78] sm:$0xff]
      %v446 = vld [vmem:[#allocation12] sm:$0xff]
      %v447 = vld [vmem:[#allocation12 + $0x8] sm:$0xff]
      %v448 = vld [vmem:[#allocation12 + $0x10] sm:$0xff]
      %v449 = vld [vmem:[#allocation12 + $0x18] sm:$0xff]
      %v450 = vld [vmem:[#allocation12 + $0x20] sm:$0xff]
      %v451 = vld [vmem:[#allocation12 + $0x28] sm:$0xff]
      %v452 = vld [vmem:[#allocation12 + $0x30] sm:$0xff]
      %v453 = vld [vmem:[#allocation12 + $0x38] sm:$0xff]
      %v454 = vld [vmem:[#allocation12 + $0x40] sm:$0xff]
      %v455 = vld [vmem:[#allocation12 + $0x48] sm:$0xff]
      %v456 = vld [vmem:[#allocation12 + $0x50] sm:$0xff]
      %v457 = vld [vmem:[#allocation12 + $0x58] sm:$0xff]
      %v458 = vld [vmem:[#allocation12 + $0x60] sm:$0xff]
      %v459 = vld [vmem:[#allocation12 + $0x68] sm:$0xff]
      %v460 = vld [vmem:[#allocation12 + $0x70] sm:$0xff]
      %v461 = vld [vmem:[#allocation12 + $0x78] sm:$0xff]
      %v462 = vld [vmem:[#allocation11] sm:$0xff]
      %v463 = vld [vmem:[#allocation11 + $0x8] sm:$0xff]
      %v464 = vld [vmem:[#allocation11 + $0x10] sm:$0xff]
      %v465 = vld [vmem:[#allocation11 + $0x18] sm:$0xff]
      %v466 = vld [vmem:[#allocation11 + $0x20] sm:$0xff]
      %v467 = vld [vmem:[#allocation11 + $0x28] sm:$0xff]
      %v468 = vld [vmem:[#allocation11 + $0x30] sm:$0xff]
      %v469 = vld [vmem:[#allocation11 + $0x38] sm:$0xff]
      %v470 = vld [vmem:[#allocation11 + $0x40] sm:$0xff]
      %v471 = vld [vmem:[#allocation11 + $0x48] sm:$0xff]
      %v472 = vld [vmem:[#allocation11 + $0x50] sm:$0xff]
      %v473 = vld [vmem:[#allocation11 + $0x58] sm:$0xff]
      %v474 = vld [vmem:[#allocation11 + $0x60] sm:$0xff]
      %v475 = vld [vmem:[#allocation11 + $0x68] sm:$0xff]
      %v476 = vld [vmem:[#allocation11 + $0x70] sm:$0xff]
      %v477 = vld [vmem:[#allocation11 + $0x78] sm:$0xff]
      %v478 = vld [vmem:[#allocation14] sm:$0xff]
      %v479 = vld [vmem:[#allocation14 + $0x8] sm:$0xff]
      %v480 = vld [vmem:[#allocation14 + $0x10] sm:$0xff]
      %v481 = vld [vmem:[#allocation14 + $0x18] sm:$0xff]
      %v482 = vld [vmem:[#allocation14 + $0x20] sm:$0xff]
      %v483 = vld [vmem:[#allocation14 + $0x28] sm:$0xff]
      %v484 = vld [vmem:[#allocation14 + $0x30] sm:$0xff]
      %v485 = vld [vmem:[#allocation14 + $0x38] sm:$0xff]
      %v486 = vld [vmem:[#allocation14 + $0x40] sm:$0xff]
      %v487 = vld [vmem:[#allocation14 + $0x48] sm:$0xff]
      %v488 = vld [vmem:[#allocation14 + $0x50] sm:$0xff]
      %v489 = vld [vmem:[#allocation14 + $0x58] sm:$0xff]
      %v490 = vld [vmem:[#allocation14 + $0x60] sm:$0xff]
      %v491 = vld [vmem:[#allocation14 + $0x68] sm:$0xff]
      %v492 = vld [vmem:[#allocation14 + $0x70] sm:$0xff]
      %v493 = vld [vmem:[#allocation14 + $0x78] sm:$0xff]
      %494 = vmatprep.subr.mxu0 0.0
      %495 = vmatpush1.msra.mxu0 %v493
      %496 = vmatprep.subr.mxu0 0.0
      %497 = vmatpush1.msra.mxu0 %v492
      %498 = vmatprep.subr.mxu0 0.0
      %499 = vmatpush1.msra.mxu0 %v491
      %500 = vmatprep.subr.mxu0 0.0
      %501 = vmatpush1.msra.mxu0 %v490
      %502 = vmatprep.subr.mxu0 0.0
      %503 = vmatpush1.msra.mxu0 %v489
      %504 = vmatprep.subr.mxu0 0.0
      %505 = vmatpush1.msra.mxu0 %v488
      %506 = vmatprep.subr.mxu0 0.0
      %507 = vmatpush1.msra.mxu0 %v487
      %508 = vmatprep.subr.mxu0 0.0
      %509 = vmatpush1.msra.mxu0 %v486
      %510 = vmatprep.subr.mxu0 0.0
      %511 = vmatpush1.msra.mxu0 %v485
      %512 = vmatprep.subr.mxu0 0.0
      %513 = vmatpush1.msra.mxu0 %v484
      %514 = vmatprep.subr.mxu0 0.0
      %515 = vmatpush1.msra.mxu0 %v483
      %516 = vmatprep.subr.mxu0 0.0
      %517 = vmatpush1.msra.mxu0 %v482
      %518 = vmatprep.subr.mxu0 0.0
      %519 = vmatpush1.msra.mxu0 %v481
      %520 = vmatprep.subr.mxu0 0.0
      %521 = vmatpush1.msra.mxu0 %v480
      %522 = vmatprep.subr.mxu0 0.0
      %523 = vmatpush1.msra.mxu0 %v479
      %524 = vmatprep.subr.mxu0 0.0
      %525 = vmatpush1.msra.mxu0 %v478
      %526 = vmatprep.subr.mxu0 0.0
      %527 = vmatpush2.msra.mxu0 0.0
      %528 = vmatprep.subr.mxu0 0.0
      %529 = vmatpush2.msra.mxu0 0.0
      %530 = vmatprep.subr.mxu0 0.0
      %531 = vmatpush2.msra.mxu0 0.0
      %532 = vmatprep.subr.mxu0 0.0
      %533 = vmatpush2.msra.mxu0 0.0
      %534 = vmatprep.subr.mxu0 0.0
      %535 = vmatpush2.msra.mxu0 0.0
      %536 = vmatprep.subr.mxu0 0.0
      %537 = vmatpush2.msra.mxu0 0.0
      %538 = vmatprep.subr.mxu0 0.0
      %539 = vmatpush2.msra.mxu0 0.0
      %540 = vmatprep.subr.mxu0 0.0
      %541 = vmatpush2.msra.mxu0 0.0
      %542 = vmatprep.subr.mxu0 0.0
      %543 = vmatpush2.msra.mxu0 0.0
      %544 = vmatprep.subr.mxu0 0.0
      %545 = vmatpush2.msra.mxu0 0.0
      %546 = vmatprep.subr.mxu0 0.0
      %547 = vmatpush2.msra.mxu0 0.0
      %548 = vmatprep.subr.mxu0 0.0
      %549 = vmatpush2.msra.mxu0 0.0
      %550 = vmatprep.subr.mxu0 0.0
      %551 = vmatpush2.msra.mxu0 0.0
      %552 = vmatprep.subr.mxu0 0.0
      %553 = vmatpush2.msra.mxu0 0.0
      %554 = vmatprep.subr.mxu0 0.0
      %555 = vmatpush2.msra.mxu0 0.0
      %556 = vmatprep.subr.mxu0 0.0
      %557 = vmatpush2.msra.mxu0 0.0
      %558 = vmatprep.mubr.f32.mxu0 0.0
      %559 = vmatmul.mubr.f32.gmra.mxu0 %v462
      %v560 = vpop.f32.mrf.mxu0
      %v561 = vadd.f32 0.0, %v560
      %v562 = vpop.f32.mrf.mxu0
      %563 = vmatprep.mubr.f32.mxu0 0.0
      %564 = vmatmul.mubr.f32.gmra.mxu0 %v463
      %v565 = vpop.f32.mrf.mxu0
      %v566 = vadd.f32 0.0, %v565
      %v567 = vpop.f32.mrf.mxu0
      %568 = vmatprep.mubr.f32.mxu0 0.0
      %569 = vmatmul.mubr.f32.gmra.mxu0 %v464
      %v570 = vpop.f32.mrf.mxu0
      %v571 = vadd.f32 0.0, %v570
      %v572 = vpop.f32.mrf.mxu0
      %573 = vmatprep.mubr.f32.mxu0 0.0
      %574 = vmatmul.mubr.f32.gmra.mxu0 %v465
      %v575 = vpop.f32.mrf.mxu0
      %v576 = vadd.f32 0.0, %v575
      %v577 = vpop.f32.mrf.mxu0
      %578 = vmatprep.mubr.f32.mxu0 0.0
      %579 = vmatmul.mubr.f32.gmra.mxu0 %v466
      %v580 = vpop.f32.mrf.mxu0
      %v581 = vadd.f32 0.0, %v580
      %v582 = vpop.f32.mrf.mxu0
      %583 = vmatprep.mubr.f32.mxu0 0.0
      %584 = vmatmul.mubr.f32.gmra.mxu0 %v467
      %v585 = vpop.f32.mrf.mxu0
      %v586 = vadd.f32 0.0, %v585
      %v587 = vpop.f32.mrf.mxu0
      %588 = vmatprep.mubr.f32.mxu0 0.0
      %589 = vmatmul.mubr.f32.gmra.mxu0 %v468
      %v590 = vpop.f32.mrf.mxu0
      %v591 = vadd.f32 0.0, %v590
      %v592 = vpop.f32.mrf.mxu0
      %593 = vmatprep.mubr.f32.mxu0 0.0
      %594 = vmatmul.mubr.f32.gmra.mxu0 %v469
      %v595 = vpop.f32.mrf.mxu0
      %v596 = vadd.f32 0.0, %v595
      %v597 = vpop.f32.mrf.mxu0
      %598 = vmatprep.mubr.f32.mxu0 0.0
      %599 = vmatmul.mubr.f32.gmra.mxu0 %v470
      %v600 = vpop.f32.mrf.mxu0
      %v601 = vadd.f32 0.0, %v600
      %v602 = vpop.f32.mrf.mxu0
      %603 = vmatprep.mubr.f32.mxu0 0.0
      %604 = vmatmul.mubr.f32.gmra.mxu0 %v471
      %v605 = vpop.f32.mrf.mxu0
      %v606 = vadd.f32 0.0, %v605
      %v607 = vpop.f32.mrf.mxu0
      %608 = vmatprep.mubr.f32.mxu0 0.0
      %609 = vmatmul.mubr.f32.gmra.mxu0 %v472
      %v610 = vpop.f32.mrf.mxu0
      %v611 = vadd.f32 0.0, %v610
      %v612 = vpop.f32.mrf.mxu0
      %613 = vmatprep.mubr.f32.mxu0 0.0
      %614 = vmatmul.mubr.f32.gmra.mxu0 %v473
      %v615 = vpop.f32.mrf.mxu0
      %v616 = vadd.f32 0.0, %v615
      %v617 = vpop.f32.mrf.mxu0
      %618 = vmatprep.mubr.f32.mxu0 0.0
      %619 = vmatmul.mubr.f32.gmra.mxu0 %v474
      %v620 = vpop.f32.mrf.mxu0
      %v621 = vadd.f32 0.0, %v620
      %v622 = vpop.f32.mrf.mxu0
      %623 = vmatprep.mubr.f32.mxu0 0.0
      %624 = vmatmul.mubr.f32.gmra.mxu0 %v475
      %v625 = vpop.f32.mrf.mxu0
      %v626 = vadd.f32 0.0, %v625
      %v627 = vpop.f32.mrf.mxu0
      %628 = vmatprep.mubr.f32.mxu0 0.0
      %629 = vmatmul.mubr.f32.gmra.mxu0 %v476
      %v630 = vpop.f32.mrf.mxu0
      %v631 = vadd.f32 0.0, %v630
      %v632 = vpop.f32.mrf.mxu0
      %633 = vmatprep.mubr.f32.mxu0 0.0
      %634 = vmatmul.mubr.f32.gmra.mxu0 %v477
      %v635 = vpop.f32.mrf.mxu0
      %v636 = vadd.f32 0.0, %v635
      %v637 = vpop.f32.mrf.mxu0
      %638 = vdwg.mxu0
      %639 = vmatprep.subr.mxu0 0.0
      %640 = vmatpush1.msra.mxu0 %v461
      %641 = vmatprep.subr.mxu0 0.0
      %642 = vmatpush1.msra.mxu0 %v460
      %643 = vmatprep.subr.mxu0 0.0
      %644 = vmatpush1.msra.mxu0 %v459
      %645 = vmatprep.subr.mxu0 0.0
      %646 = vmatpush1.msra.mxu0 %v458
      %647 = vmatprep.subr.mxu0 0.0
      %648 = vmatpush1.msra.mxu0 %v457
      %649 = vmatprep.subr.mxu0 0.0
      %650 = vmatpush1.msra.mxu0 %v456
      %651 = vmatprep.subr.mxu0 0.0
      %652 = vmatpush1.msra.mxu0 %v455
      %653 = vmatprep.subr.mxu0 0.0
      %654 = vmatpush1.msra.mxu0 %v454
      %655 = vmatprep.subr.mxu0 0.0
      %656 = vmatpush1.msra.mxu0 %v453
      %657 = vmatprep.subr.mxu0 0.0
      %658 = vmatpush1.msra.mxu0 %v452
      %659 = vmatprep.subr.mxu0 0.0
      %660 = vmatpush1.msra.mxu0 %v451
      %661 = vmatprep.subr.mxu0 0.0
      %662 = vmatpush1.msra.mxu0 %v450
      %663 = vmatprep.subr.mxu0 0.0
      %664 = vmatpush1.msra.mxu0 %v449
      %665 = vmatprep.subr.mxu0 0.0
      %666 = vmatpush1.msra.mxu0 %v448
      %667 = vmatprep.subr.mxu0 0.0
      %668 = vmatpush1.msra.mxu0 %v447
      %669 = vmatprep.subr.mxu0 0.0
      %670 = vmatpush1.msra.mxu0 %v446
      %671 = vmatprep.subr.mxu0 0.0
      %672 = vmatpush2.msra.mxu0 0.0
      %673 = vmatprep.subr.mxu0 0.0
      %674 = vmatpush2.msra.mxu0 0.0
      %675 = vmatprep.subr.mxu0 0.0
      %676 = vmatpush2.msra.mxu0 0.0
      %677 = vmatprep.subr.mxu0 0.0
      %678 = vmatpush2.msra.mxu0 0.0
      %679 = vmatprep.subr.mxu0 0.0
      %680 = vmatpush2.msra.mxu0 0.0
      %681 = vmatprep.subr.mxu0 0.0
      %682 = vmatpush2.msra.mxu0 0.0
      %683 = vmatprep.subr.mxu0 0.0
      %684 = vmatpush2.msra.mxu0 0.0
      %685 = vmatprep.subr.mxu0 0.0
      %686 = vmatpush2.msra.mxu0 0.0
      %687 = vmatprep.subr.mxu0 0.0
      %688 = vmatpush2.msra.mxu0 0.0
      %689 = vmatprep.subr.mxu0 0.0
      %690 = vmatpush2.msra.mxu0 0.0
      %691 = vmatprep.subr.mxu0 0.0
      %692 = vmatpush2.msra.mxu0 0.0
      %693 = vmatprep.subr.mxu0 0.0
      %694 = vmatpush2.msra.mxu0 0.0
      %695 = vmatprep.subr.mxu0 0.0
      %696 = vmatpush2.msra.mxu0 0.0
      %697 = vmatprep.subr.mxu0 0.0
      %698 = vmatpush2.msra.mxu0 0.0
      %699 = vmatprep.subr.mxu0 0.0
      %700 = vmatpush2.msra.mxu0 0.0
      %701 = vmatprep.subr.mxu0 0.0
      %702 = vmatpush2.msra.mxu0 0.0
      %703 = vmatprep.mubr.f32.mxu0 0.0
      %704 = vmatmul.mubr.f32.gmra.mxu0 %v430
      %v705 = vpop.f32.mrf.mxu0
      %v706 = vadd.f32 %v561, %v705
      %v707 = vpop.f32.mrf.mxu0
      %708 = vmatprep.mubr.f32.mxu0 0.0
      %709 = vmatmul.mubr.f32.gmra.mxu0 %v431
      %v710 = vpop.f32.mrf.mxu0
      %v711 = vadd.f32 %v566, %v710
      %v712 = vpop.f32.mrf.mxu0
      %713 = vmatprep.mubr.f32.mxu0 0.0
      %714 = vmatmul.mubr.f32.gmra.mxu0 %v432
      %v715 = vpop.f32.mrf.mxu0
      %v716 = vadd.f32 %v571, %v715
      %v717 = vpop.f32.mrf.mxu0
      %718 = vmatprep.mubr.f32.mxu0 0.0
      %719 = vmatmul.mubr.f32.gmra.mxu0 %v433
      %v720 = vpop.f32.mrf.mxu0
      %v721 = vadd.f32 %v576, %v720
      %v722 = vpop.f32.mrf.mxu0
      %723 = vmatprep.mubr.f32.mxu0 0.0
      %724 = vmatmul.mubr.f32.gmra.mxu0 %v434
      %v725 = vpop.f32.mrf.mxu0
      %v726 = vadd.f32 %v581, %v725
      %v727 = vpop.f32.mrf.mxu0
      %728 = vmatprep.mubr.f32.mxu0 0.0
      %729 = vmatmul.mubr.f32.gmra.mxu0 %v435
      %v730 = vpop.f32.mrf.mxu0
      %v731 = vadd.f32 %v586, %v730
      %v732 = vpop.f32.mrf.mxu0
      %733 = vmatprep.mubr.f32.mxu0 0.0
      %734 = vmatmul.mubr.f32.gmra.mxu0 %v436
      %v735 = vpop.f32.mrf.mxu0
      %v736 = vadd.f32 %v591, %v735
      %v737 = vpop.f32.mrf.mxu0
      %738 = vmatprep.mubr.f32.mxu0 0.0
      %739 = vmatmul.mubr.f32.gmra.mxu0 %v437
      %v740 = vpop.f32.mrf.mxu0
      %v741 = vadd.f32 %v596, %v740
      %v742 = vpop.f32.mrf.mxu0
      %743 = vmatprep.mubr.f32.mxu0 0.0
      %744 = vmatmul.mubr.f32.gmra.mxu0 %v438
      %v745 = vpop.f32.mrf.mxu0
      %v746 = vadd.f32 %v601, %v745
      %v747 = vpop.f32.mrf.mxu0
      %748 = vmatprep.mubr.f32.mxu0 0.0
      %749 = vmatmul.mubr.f32.gmra.mxu0 %v439
      %v750 = vpop.f32.mrf.mxu0
      %v751 = vadd.f32 %v606, %v750
      %v752 = vpop.f32.mrf.mxu0
      %753 = vmatprep.mubr.f32.mxu0 0.0
      %754 = vmatmul.mubr.f32.gmra.mxu0 %v440
      %v755 = vpop.f32.mrf.mxu0
      %v756 = vadd.f32 %v611, %v755
      %v757 = vpop.f32.mrf.mxu0
      %758 = vmatprep.mubr.f32.mxu0 0.0
      %759 = vmatmul.mubr.f32.gmra.mxu0 %v441
      %v760 = vpop.f32.mrf.mxu0
      %v761 = vadd.f32 %v616, %v760
      %v762 = vpop.f32.mrf.mxu0
      %763 = vmatprep.mubr.f32.mxu0 0.0
      %764 = vmatmul.mubr.f32.gmra.mxu0 %v442
      %v765 = vpop.f32.mrf.mxu0
      %v766 = vadd.f32 %v621, %v765
      %v767 = vpop.f32.mrf.mxu0
      %768 = vmatprep.mubr.f32.mxu0 0.0
      %769 = vmatmul.mubr.f32.gmra.mxu0 %v443
      %v770 = vpop.f32.mrf.mxu0
      %v771 = vadd.f32 %v626, %v770
      %v772 = vpop.f32.mrf.mxu0
      %773 = vmatprep.mubr.f32.mxu0 0.0
      %774 = vmatmul.mubr.f32.gmra.mxu0 %v444
      %v775 = vpop.f32.mrf.mxu0
      %v776 = vadd.f32 %v631, %v775
      %v777 = vpop.f32.mrf.mxu0
      %778 = vmatprep.mubr.f32.mxu0 0.0
      %779 = vmatmul.mubr.f32.gmra.mxu0 %v445
      %v780 = vpop.f32.mrf.mxu0
      %v781 = vadd.f32 %v636, %v780
      %v782 = vpop.f32.mrf.mxu0
      %783 = vdwg.mxu0
      %v784 = vld [vmem:[%s8] sm:$0x1]
      %v786 = vlaneseq
      %v787 = vshrl.u32 %v786, 7
      %v788 = vsub.s32 0, %v787
      %v789 = vrot.slane %v784, %v788
      %v791 = vadd.f32 %v706, %v789
      %v792 = vadd.f32 %v711, %v789
      %v793 = vadd.f32 %v716, %v789
      %v794 = vadd.f32 %v721, %v789
      %v795 = vadd.f32 %v726, %v789
      %v796 = vadd.f32 %v731, %v789
      %v797 = vadd.f32 %v736, %v789
      %v798 = vadd.f32 %v741, %v789
      %v799 = vadd.f32 %v746, %v789
      %v800 = vadd.f32 %v751, %v789
      %v801 = vadd.f32 %v756, %v789
      %v802 = vadd.f32 %v761, %v789
      %v803 = vadd.f32 %v766, %v789
      %v804 = vadd.f32 %v771, %v789
      %v805 = vadd.f32 %v776, %v789
      %v806 = vadd.f32 %v781, %v789
      %v807 = vmax.f32 %v791, 0.0
      %v808 = vmax.f32 %v792, 0.0
      %v809 = vmax.f32 %v793, 0.0
      %v810 = vmax.f32 %v794, 0.0
      %v811 = vmax.f32 %v795, 0.0
      %v812 = vmax.f32 %v796, 0.0
      %v813 = vmax.f32 %v797, 0.0
      %v814 = vmax.f32 %v798, 0.0
      %v815 = vmax.f32 %v799, 0.0
      %v816 = vmax.f32 %v800, 0.0
      %v817 = vmax.f32 %v801, 0.0
      %v818 = vmax.f32 %v802, 0.0
      %v819 = vmax.f32 %v803, 0.0
      %v820 = vmax.f32 %v804, 0.0
      %v821 = vmax.f32 %v805, 0.0
      %v822 = vmax.f32 %v806, 0.0
      %v823 = vld [vmem:[%s5] sm:$0xff]
      %824 = vmatprep.subr.mxu0 0.0
      %825 = vmatpush1.msra.mxu0 %v822
      %826 = vmatprep.subr.mxu0 0.0
      %827 = vmatpush1.msra.mxu0 %v821
      %828 = vmatprep.subr.mxu0 0.0
      %829 = vmatpush1.msra.mxu0 %v820
      %830 = vmatprep.subr.mxu0 0.0
      %831 = vmatpush1.msra.mxu0 %v819
      %832 = vmatprep.subr.mxu0 0.0
      %833 = vmatpush1.msra.mxu0 %v818
      %834 = vmatprep.subr.mxu0 0.0
      %835 = vmatpush1.msra.mxu0 %v817
      %836 = vmatprep.subr.mxu0 0.0
      %837 = vmatpush1.msra.mxu0 %v816
      %838 = vmatprep.subr.mxu0 0.0
      %839 = vmatpush1.msra.mxu0 %v815
      %840 = vmatprep.subr.mxu0 0.0
      %841 = vmatpush1.msra.mxu0 %v814
      %842 = vmatprep.subr.mxu0 0.0
      %843 = vmatpush1.msra.mxu0 %v813
      %844 = vmatprep.subr.mxu0 0.0
      %845 = vmatpush1.msra.mxu0 %v812
      %846 = vmatprep.subr.mxu0 0.0
      %847 = vmatpush1.msra.mxu0 %v811
      %848 = vmatprep.subr.mxu0 0.0
      %849 = vmatpush1.msra.mxu0 %v810
      %850 = vmatprep.subr.mxu0 0.0
      %851 = vmatpush1.msra.mxu0 %v809
      %852 = vmatprep.subr.mxu0 0.0
      %853 = vmatpush1.msra.mxu0 %v808
      %854 = vmatprep.subr.mxu0 0.0
      %855 = vmatpush1.msra.mxu0 %v807
      %856 = vmatprep.subr.mxu0 0.0
      %857 = vmatpush2.msra.mxu0 0.0
      %858 = vmatprep.subr.mxu0 0.0
      %859 = vmatpush2.msra.mxu0 0.0
      %860 = vmatprep.subr.mxu0 0.0
      %861 = vmatpush2.msra.mxu0 0.0
      %862 = vmatprep.subr.mxu0 0.0
      %863 = vmatpush2.msra.mxu0 0.0
      %864 = vmatprep.subr.mxu0 0.0
      %865 = vmatpush2.msra.mxu0 0.0
      %866 = vmatprep.subr.mxu0 0.0
      %867 = vmatpush2.msra.mxu0 0.0
      %868 = vmatprep.subr.mxu0 0.0
      %869 = vmatpush2.msra.mxu0 0.0
      %870 = vmatprep.subr.mxu0 0.0
      %871 = vmatpush2.msra.mxu0 0.0
      %872 = vmatprep.subr.mxu0 0.0
      %873 = vmatpush2.msra.mxu0 0.0
      %874 = vmatprep.subr.mxu0 0.0
      %875 = vmatpush2.msra.mxu0 0.0
      %876 = vmatprep.subr.mxu0 0.0
      %877 = vmatpush2.msra.mxu0 0.0
      %878 = vmatprep.subr.mxu0 0.0
      %879 = vmatpush2.msra.mxu0 0.0
      %880 = vmatprep.subr.mxu0 0.0
      %881 = vmatpush2.msra.mxu0 0.0
      %882 = vmatprep.subr.mxu0 0.0
      %883 = vmatpush2.msra.mxu0 0.0
      %884 = vmatprep.subr.mxu0 0.0
      %885 = vmatpush2.msra.mxu0 0.0
      %886 = vmatprep.subr.mxu0 0.0
      %887 = vmatpush2.msra.mxu0 0.0
      %888 = vmatprep.mubr.f32.mxu0 0.0
      %889 = vmatmul.mubr.f32.gmra.mxu0 %v823
      %v890 = vpop.f32.mrf.mxu0
      %v891 = vadd.f32 0.0, %v890
      %v892 = vpop.f32.mrf.mxu0
      %893 = vdwg.mxu0
      %894 = vst [vmem:[#allocation15] sm:$0xff] %v891
    $region61: #{tpu_custom_call.1} parent=1 // pred_fallthru
      _
    // Predicated region
    $region62: #{tpu_custom_call.1} parent=1 // pred_check
      _
    $region63: #{tpu_custom_call.1} parent=1 // pred_check_branch
      %896 = sbr.rel (0) target = $region65
    $region64: #{tpu_custom_call.1} parent=1 // pred_region
      %s898 = ssub.s32 128, 128
      %899 = vsyncadd [#allocation8], %s898
      %s901 = sshll.u32 [#allocation15], 4
      %s902 = int_to_ptr.vmem [resolvable:$true] %s901
      %904 = dma.vmem_to_hbm [thread:$0]  %s902, 128, %s9, [#allocation8]
    $region65: #{tpu_custom_call.1} parent=1 // pred_fallthru
      _
    // Predicated region
    $region66: #{tpu_custom_call.1} parent=1 // pred_check
      _
    $region67: #{tpu_custom_call.1} parent=1 // pred_check_branch
      %906 = sbr.rel (0) target = $region69
    $region68: #{tpu_custom_call.1} parent=1 // pred_region
      %907 = dma.done [#allocation8], 128
    $region69: #{tpu_custom_call.1} parent=1 // pred_fallthru
      _
    %908 = vsyncpa [#allocation7], 1
    %909 = vsyncpa [#allocation10], 1
    %910 = vsyncpa [#allocation13], 1
    %911 = vsyncpa [#allocation8], 1

</llo_original>
